<compile_context>
chip_gen: v7x
topology: tpu7x:2x2x1
jax: 0.10.0
libtpu: 0.0.40
codegen_flags: <defaults>
</compile_context>

<pallas_src>
import jax
import jax.numpy as jnp
from jax.experimental import pallas as pl
from jax.experimental.pallas import tpu as pltpu


def _round_up(x, m):
    return ((x + m - 1) // m) * m


def _pad2(x, rows, cols):
    pr, pc = rows - x.shape[0], cols - x.shape[1]
    if pr or pc:
        x = jnp.pad(x, ((0, pr), (0, pc)))
    return x


def _head_kernel(x_ref, pw_ref, pb_ref, cw_ref, cb_ref, out_ref):
    # Cast the activation block to the weight compute dtype inside the kernel
    # (VPU cast hidden under the DMA; avoids a wrapper-side cast copy).
    x = x_ref[...].astype(pw_ref.dtype)
    # BertPooler: dense + tanh on the [CLS] row block (tanh runs on the EUP).
    pooled = jnp.tanh(
        jnp.dot(x, pw_ref[...], preferred_element_type=jnp.float32) + pb_ref[...])
    # Dropout == identity at inference.
    logits = jnp.dot(pooled.astype(cw_ref.dtype), cw_ref[...],
                     preferred_element_type=jnp.float32) + cb_ref[...]
    out_ref[...] = logits.astype(out_ref.dtype)


def prepare_sentbert_head_params(pool_w_pt, pool_b, cue_w_pt, cue_b,
                                 *, compute_dtype=jnp.bfloat16):
    """One-time weight preparation (cache the result across calls).

    pool_w_pt: (H, H) PyTorch pooler.dense.weight   (out, in) layout
    cue_w_pt:  (O, H) PyTorch cue.weight            (out, in) layout
    Transposes to (in, out), pads to lane-aligned multiples of 128, casts the
    matmul operands to compute_dtype and keeps the biases in f32.
    """
    H = pool_w_pt.shape[0]
    O = cue_w_pt.shape[0]
    Hp = _round_up(H, 128)
    Op = _round_up(O, 128)
    pw = _pad2(pool_w_pt.T, Hp, Hp).astype(compute_dtype)
    pb = _pad2(pool_b.reshape(1, H), 1, Hp).astype(jnp.float32)
    cw = _pad2(cue_w_pt.T, Hp, Op).astype(compute_dtype)
    cb = _pad2(cue_b.reshape(1, O), 1, Op).astype(jnp.float32)
    return {"pw": pw, "pb": pb, "cw": cw, "cb": cb,
            "H": H, "O": O, "Hp": Hp, "Op": Op}


def _weight_spec(shape, single_buffer):
    if single_buffer:
        # Grid-invariant operand: one VMEM buffer instead of two.
        return pl.BlockSpec(shape, lambda i: (0, 0), pipeline_mode=pl.Buffered(1))
    return pl.BlockSpec(shape, lambda i: (0, 0))


def _build_head_call(n_blocks, BN, Hp, Op, N, single_buffer_weights):
    in_specs = [
        pl.BlockSpec((BN, Hp), lambda i: (i, 0)),          # CLS rows (blocked over batch)
        _weight_spec((Hp, Hp), single_buffer_weights),      # pooler dense weight
        _weight_spec((1, Hp), single_buffer_weights),       # pooler dense bias (f32)
        _weight_spec((Hp, Op), single_buffer_weights),       # cue weight
        _weight_spec((1, Op), single_buffer_weights),        # cue bias (f32)
    ]
    return pl.pallas_call(
        _head_kernel,
        out_shape=jax.ShapeDtypeStruct((N, Op), jnp.float32),
        grid=(n_blocks,),
        in_specs=in_specs,
        out_specs=pl.BlockSpec((BN, Op), lambda i: (i, 0)),
        compiler_params=pltpu.CompilerParams(
            dimension_semantics=("parallel",)),
    )


def sentbert_cue_head(last_hidden, params, *, row_block=256):
    """last_hidden: (N, L, H) encoder output. params: prepare_sentbert_head_params().
    Returns cue_logits of shape (N, num_labels)."""
    N, L, H = last_hidden.shape
    assert H == params["H"], (H, params["H"])
    Hp, Op, O = params["Hp"], params["Op"], params["O"]

    if H == Hp:
        # Free row-major view; the first Hp columns of each row are exactly token 0,
        # so the CLS select happens in the input BlockSpec (no wrapper-side copy).
        x = last_hidden.reshape(N, L * H)
    else:
        # Fallback for non-128-multiple hidden sizes: small (N, H) slice + lane pad.
        x = _pad2(last_hidden[:, 0, :], N, Hp)

    # Row block: sublane-aligned, capped at row_block; split so v7x's two
    # TensorCores each get at least one block whenever there is enough work.
    BN = min(row_block, _round_up(N, 8))
    if N > 8 and pl.cdiv(N, BN) < 2:
        BN = max(8, _round_up(pl.cdiv(N, 2), 8))
    n_blocks = pl.cdiv(N, BN)

    args = (x, params["pw"], params["pb"], params["cw"], params["cb"])
    try:
        out = _build_head_call(n_blocks, BN, Hp, Op, N, True)(*args)
    except Exception:
        # pl.Buffered(1) pipeline_mode not supported by this JAX build: fall back to
        # the default double-buffered weight specs (identical semantics).
        out = _build_head_call(n_blocks, BN, Hp, Op, N, False)(*args)

    return out[:, :O]


def ref_forward(last_hidden, pool_w, pool_b, cue_w, cue_b):
    """Pure-JAX mirror of the PyTorch forward (pooler + dropout(identity) + cue)."""
    cls = last_hidden[:, 0, :]
    pooled = jnp.tanh(cls @ pool_w + pool_b)
    return pooled @ cue_w + cue_b


if __name__ == "__main__":
    key = jax.random.PRNGKey(0)

    # Case 1: BERT-like lane-aligned hidden size (H % 128 == 0) so the CLS select is
    # folded into the BlockSpec; ragged batch (N=5) exercises the partial last block.
    N, L, H, O = 5, 8, 128, 3
    ks = jax.random.split(key, 5)
    last_hidden = jax.random.normal(ks[0], (N, L, H), jnp.float32)
    pool_w_pt = jax.random.normal(ks[1], (H, H), jnp.float32) * 0.05   # (out, in)
    pool_b = jax.random.normal(ks[2], (H,), jnp.float32) * 0.05
    cue_w_pt = jax.random.normal(ks[3], (O, H), jnp.float32) * 0.05    # (out, in)
    cue_b = jax.random.normal(ks[4], (O,), jnp.float32) * 0.05
    ref = ref_forward(last_hidden, pool_w_pt.T, pool_b, cue_w_pt.T, cue_b)

    # f32 path: exact check against the pure-JAX reference.
    params_f32 = prepare_sentbert_head_params(pool_w_pt, pool_b, cue_w_pt, cue_b,
                                              compute_dtype=jnp.float32)
    out_f32 = jax.block_until_ready(sentbert_cue_head(last_hidden, params_f32))
    assert out_f32.shape == (N, O), out_f32.shape
    if not bool(jnp.allclose(out_f32, ref, atol=1e-4, rtol=1e-4)):
        raise SystemExit("MISMATCH (f32): max abs err = %e"
                         % float(jnp.max(jnp.abs(out_f32 - ref))))

    # bf16 default path (halves weight HBM traffic; f32 MXU accumulation): loose check.
    params_bf16 = prepare_sentbert_head_params(pool_w_pt, pool_b, cue_w_pt, cue_b)
    out_bf16 = jax.block_until_ready(sentbert_cue_head(last_hidden, params_bf16))
    assert out_bf16.shape == (N, O), out_bf16.shape
    if not bool(jnp.allclose(out_bf16, ref, atol=3e-2, rtol=3e-2)):
        raise SystemExit("MISMATCH (bf16): max abs err = %e"
                         % float(jnp.max(jnp.abs(out_bf16 - ref))))

    # Case 2: non-128-multiple hidden size (fallback CLS slice) + >1 grid blocks
    # (N=20 -> two row blocks, ragged tail), f32 for an exact check.
    N2, L2, H2, O2 = 20, 8, 64, 3
    ks2 = jax.random.split(jax.random.PRNGKey(1), 5)
    lh2 = jax.random.normal(ks2[0], (N2, L2, H2), jnp.float32)
    pw2_pt = jax.random.normal(ks2[1], (H2, H2), jnp.float32) * 0.05
    pb2 = jax.random.normal(ks2[2], (H2,), jnp.float32) * 0.05
    cw2_pt = jax.random.normal(ks2[3], (O2, H2), jnp.float32) * 0.05
    cb2 = jax.random.normal(ks2[4], (O2,), jnp.float32) * 0.05
    params2 = prepare_sentbert_head_params(pw2_pt, pb2, cw2_pt, cb2,
                                           compute_dtype=jnp.float32)
    out2 = jax.block_until_ready(sentbert_cue_head(lh2, params2))
    ref2 = ref_forward(lh2, pw2_pt.T, pb2, cw2_pt.T, cb2)
    assert out2.shape == (N2, O2), out2.shape
    if not bool(jnp.allclose(out2, ref2, atol=1e-4, rtol=1e-4)):
        raise SystemExit("MISMATCH (case 2): max abs err = %e"
                         % float(jnp.max(jnp.abs(out2 - ref2))))

    print("KERNEL_OK")
</pallas_src>

<mosaic_0001>
module attributes {stable_mosaic.version = 11 : i64} {
  func.func @_head_kernel(%arg0: i32, %arg1: memref<8x128xf32, #tpu.memory_space<vmem>>, %arg2: memref<128x128xf32, #tpu.memory_space<vmem>>, %arg3: memref<1x128xf32, #tpu.memory_space<vmem>>, %arg4: memref<128x128xf32, #tpu.memory_space<vmem>>, %arg5: memref<1x128xf32, #tpu.memory_space<vmem>>, %arg6: memref<8x128xf32, #tpu.memory_space<vmem>>) attributes {dimension_semantics = [#tpu.dimension_semantics<parallel>], iteration_bounds = array<i64: 1>, scalar_prefetch = 0 : i64, scratch_operands = 0 : i64, tpu.core_type = #tpu.core_type<tc>, window_params = [{transform_indices = @transform_0, window_bounds = array<i64: 8, 128>}, {pipeline_mode = #tpu.pipeline_mode<synchronous>, transform_indices = @transform_1, window_bounds = array<i64: 128, 128>}, {pipeline_mode = #tpu.pipeline_mode<synchronous>, transform_indices = @transform_2, window_bounds = array<i64: 1, 128>}, {pipeline_mode = #tpu.pipeline_mode<synchronous>, transform_indices = @transform_3, window_bounds = array<i64: 128, 128>}, {pipeline_mode = #tpu.pipeline_mode<synchronous>, transform_indices = @transform_4, window_bounds = array<i64: 1, 128>}, {transform_indices = @transform_5, window_bounds = array<i64: 8, 128>}]} {
    %c0 = arith.constant 0 : index
    %c0_0 = arith.constant 0 : index
    %0 = vector.load %arg1[%c0, %c0_0] : memref<8x128xf32, #tpu.memory_space<vmem>>, vector<8x128xf32>
    %c0_1 = arith.constant 0 : index
    %c0_2 = arith.constant 0 : index
    %1 = vector.load %arg2[%c0_1, %c0_2] : memref<128x128xf32, #tpu.memory_space<vmem>>, vector<128x128xf32>
    %cst = arith.constant dense<0.000000e+00> : vector<8x128xf32>
    %2 = tpu.matmul %0, %1, %cst {dimension_numbers = #tpu.dot_dimension_numbers<[1], [0], [0], [1], [0, 0, 1, 1], [], []>} : vector<8x128xf32>, vector<128x128xf32>, vector<8x128xf32> -> vector<8x128xf32>
    %c0_3 = arith.constant 0 : index
    %c0_4 = arith.constant 0 : index
    %3 = vector.load %arg3[%c0_3, %c0_4] : memref<1x128xf32, #tpu.memory_space<vmem>>, vector<1x128xf32>
    %4 = vector.broadcast %3 : vector<1x128xf32> to vector<8x128xf32>
    %5 = arith.addf %2, %4 : vector<8x128xf32>
    %6 = math.tanh %5 : vector<8x128xf32>
    %c0_5 = arith.constant 0 : index
    %c0_6 = arith.constant 0 : index
    %7 = vector.load %arg4[%c0_5, %c0_6] : memref<128x128xf32, #tpu.memory_space<vmem>>, vector<128x128xf32>
    %cst_7 = arith.constant dense<0.000000e+00> : vector<8x128xf32>
    %8 = tpu.matmul %6, %7, %cst_7 {dimension_numbers = #tpu.dot_dimension_numbers<[1], [0], [0], [1], [0, 0, 1, 1], [], []>} : vector<8x128xf32>, vector<128x128xf32>, vector<8x128xf32> -> vector<8x128xf32>
    %c0_8 = arith.constant 0 : index
    %c0_9 = arith.constant 0 : index
    %9 = vector.load %arg5[%c0_8, %c0_9] : memref<1x128xf32, #tpu.memory_space<vmem>>, vector<1x128xf32>
    %10 = vector.broadcast %9 : vector<1x128xf32> to vector<8x128xf32>
    %11 = arith.addf %8, %10 : vector<8x128xf32>
    %c0_10 = arith.constant 0 : index
    %c0_11 = arith.constant 0 : index
    %12 = vector.load %arg6[%c0_10, %c0_11] : memref<8x128xf32, #tpu.memory_space<vmem>>, vector<8x128xf32>
    tpu.vector_store %arg6[%c0_10, %c0_11], %11 {strides = array<i32>} : memref<8x128xf32, #tpu.memory_space<vmem>>, vector<8x128xf32>,
    return
  }
  func.func @transform_0(%arg0: i32) -> (i32, i32) {
    %c0_i32 = arith.constant 0 : i32
    %c0_i32_0 = arith.constant 0 : i32
    return %arg0, %c0_i32 : i32, i32
  }
  func.func @transform_1(%arg0: i32) -> (i32, i32) {
    %c0_i32 = arith.constant 0 : i32
    %c0_i32_0 = arith.constant 0 : i32
    %c0_i32_1 = arith.constant 0 : i32
    return %c0_i32, %c0_i32_0 : i32, i32
  }
  func.func @transform_2(%arg0: i32) -> (i32, i32) {
    %c0_i32 = arith.constant 0 : i32
    %c0_i32_0 = arith.constant 0 : i32
    %c0_i32_1 = arith.constant 0 : i32
    return %c0_i32, %c0_i32_0 : i32, i32
  }
  func.func @transform_3(%arg0: i32) -> (i32, i32) {
    %c0_i32 = arith.constant 0 : i32
    %c0_i32_0 = arith.constant 0 : i32
    %c0_i32_1 = arith.constant 0 : i32
    return %c0_i32, %c0_i32_0 : i32, i32
  }
  func.func @transform_4(%arg0: i32) -> (i32, i32) {
    %c0_i32 = arith.constant 0 : i32
    %c0_i32_0 = arith.constant 0 : i32
    %c0_i32_1 = arith.constant 0 : i32
    return %c0_i32, %c0_i32_0 : i32, i32
  }
  func.func @transform_5(%arg0: i32) -> (i32, i32) {
    %c0_i32 = arith.constant 0 : i32
    %c0_i32_0 = arith.constant 0 : i32
    return %arg0, %c0_i32 : i32, i32
  }
}

module attributes {stable_mosaic.version = 11 : i64} {
  func.func @_head_kernel(%arg0: i32, %arg1: memref<8x128xf32, #tpu.memory_space<vmem>>, %arg2: memref<128x128xf32, #tpu.memory_space<vmem>>, %arg3: memref<1x128xf32, #tpu.memory_space<vmem>>, %arg4: memref<128x128xf32, #tpu.memory_space<vmem>>, %arg5: memref<1x128xf32, #tpu.memory_space<vmem>>, %arg6: memref<8x128xf32, #tpu.memory_space<vmem>>) attributes {dimension_semantics = [#tpu.dimension_semantics<parallel>], iteration_bounds = array<i64: 1>, scalar_prefetch = 0 : i64, scratch_operands = 0 : i64, tpu.core_type = #tpu.core_type<tc>, window_params = [{transform_indices = @transform_0, window_bounds = array<i64: 8, 128>}, {pipeline_mode = #tpu.pipeline_mode<synchronous>, transform_indices = @transform_1, window_bounds = array<i64: 128, 128>}, {pipeline_mode = #tpu.pipeline_mode<synchronous>, transform_indices = @transform_2, window_bounds = array<i64: 1, 128>}, {pipeline_mode = #tpu.pipeline_mode<synchronous>, transform_indices = @transform_3, window_bounds = array<i64: 128, 128>}, {pipeline_mode = #tpu.pipeline_mode<synchronous>, transform_indices = @transform_4, window_bounds = array<i64: 1, 128>}, {transform_indices = @transform_5, window_bounds = array<i64: 8, 128>}]} {
    %c0 = arith.constant 0 : index
    %c0_0 = arith.constant 0 : index
    %0 = vector.load %arg1[%c0, %c0_0] : memref<8x128xf32, #tpu.memory_space<vmem>>, vector<8x128xf32>
    %c0_1 = arith.constant 0 : index
    %c0_2 = arith.constant 0 : index
    %1 = vector.load %arg2[%c0_1, %c0_2] : memref<128x128xf32, #tpu.memory_space<vmem>>, vector<128x128xf32>
    %cst = arith.constant dense<0.000000e+00> : vector<8x128xf32>
    %2 = tpu.matmul %0, %1, %cst {dimension_numbers = #tpu.dot_dimension_numbers<[1], [0], [0], [1], [0, 0, 1, 1], [], []>} : vector<8x128xf32>, vector<128x128xf32>, vector<8x128xf32> -> vector<8x128xf32>
    %c0_3 = arith.constant 0 : index
    %c0_4 = arith.constant 0 : index
    %3 = vector.load %arg3[%c0_3, %c0_4] : memref<1x128xf32, #tpu.memory_space<vmem>>, vector<1x128xf32>
    %4 = vector.broadcast %3 : vector<1x128xf32> to vector<8x128xf32>
    %5 = arith.addf %2, %4 : vector<8x128xf32>
    %6 = math.tanh %5 : vector<8x128xf32>
    %c0_5 = arith.constant 0 : index
    %c0_6 = arith.constant 0 : index
    %7 = vector.load %arg4[%c0_5, %c0_6] : memref<128x128xf32, #tpu.memory_space<vmem>>, vector<128x128xf32>
    %cst_7 = arith.constant dense<0.000000e+00> : vector<8x128xf32>
    %8 = tpu.matmul %6, %7, %cst_7 {dimension_numbers = #tpu.dot_dimension_numbers<[1], [0], [0], [1], [0, 0, 1, 1], [], []>} : vector<8x128xf32>, vector<128x128xf32>, vector<8x128xf32> -> vector<8x128xf32>
    %c0_8 = arith.constant 0 : index
    %c0_9 = arith.constant 0 : index
    %9 = vector.load %arg5[%c0_8, %c0_9] : memref<1x128xf32, #tpu.memory_space<vmem>>, vector<1x128xf32>
    %10 = vector.broadcast %9 : vector<1x128xf32> to vector<8x128xf32>
    %11 = arith.addf %8, %10 : vector<8x128xf32>
    %c0_10 = arith.constant 0 : index
    %c0_11 = arith.constant 0 : index
    %12 = vector.load %arg6[%c0_10, %c0_11] : memref<8x128xf32, #tpu.memory_space<vmem>>, vector<8x128xf32>
    tpu.vector_store %arg6[%c0_10, %c0_11], %11 {strides = array<i32>} : memref<8x128xf32, #tpu.memory_space<vmem>>, vector<8x128xf32>,
    return
  }
  func.func @transform_0(%arg0: i32) -> (i32, i32) {
    %c0_i32 = arith.constant 0 : i32
    %c0_i32_0 = arith.constant 0 : i32
    return %arg0, %c0_i32 : i32, i32
  }
  func.func @transform_1(%arg0: i32) -> (i32, i32) {
    %c0_i32 = arith.constant 0 : i32
    %c0_i32_0 = arith.constant 0 : i32
    %c0_i32_1 = arith.constant 0 : i32
    return %c0_i32, %c0_i32_0 : i32, i32
  }
  func.func @transform_2(%arg0: i32) -> (i32, i32) {
    %c0_i32 = arith.constant 0 : i32
    %c0_i32_0 = arith.constant 0 : i32
    %c0_i32_1 = arith.constant 0 : i32
    return %c0_i32, %c0_i32_0 : i32, i32
  }
  func.func @transform_3(%arg0: i32) -> (i32, i32) {
    %c0_i32 = arith.constant 0 : i32
    %c0_i32_0 = arith.constant 0 : i32
    %c0_i32_1 = arith.constant 0 : i32
    return %c0_i32, %c0_i32_0 : i32, i32
  }
  func.func @transform_4(%arg0: i32) -> (i32, i32) {
    %c0_i32 = arith.constant 0 : i32
    %c0_i32_0 = arith.constant 0 : i32
    %c0_i32_1 = arith.constant 0 : i32
    return %c0_i32, %c0_i32_0 : i32, i32
  }
  func.func @transform_5(%arg0: i32) -> (i32, i32) {
    %c0_i32 = arith.constant 0 : i32
    %c0_i32_0 = arith.constant 0 : i32
    return %arg0, %c0_i32 : i32, i32
  }
}

</mosaic_0001>

<llo_original>
// kernel: tpu_custom_call.1
$region0: #{tpu_custom_call.1}
  #allocation0 [shape = 'u32[]', space=smem, size = 0x4, offset = 0x4, fixed_abs, tag = 'smem constant byte address 0x4 - core index']
  #allocation1 [shape = 'u32[144,128]{1,0:T(1,128)}', space=vmem, size = 0x12000, scoped, tag = 'internal scratch']
  %s0 = inlined_call_operand.hbm [shape: f32[5,1024], index: 0, kind: input, shape index: {}]
  %s1 = inlined_call_operand.hbm [shape: f32[128,128], index: 1, kind: input, shape index: {}]
  %s2 = inlined_call_operand.vmem [shape: f32[1,128], index: 2, kind: input, shape index: {}]
  %s3 = inlined_call_operand.hbm [shape: f32[128,128], index: 3, kind: input, shape index: {}]
  %s4 = inlined_call_operand.vmem [shape: f32[1,128], index: 4, kind: input, shape index: {}]
  %s5 = inlined_call_operand.hbm [shape: f32[5,128], index: 5, kind: output, shape index: {}]
  %s6 = sld [smem:[#allocation0]]
  $region42: #{tpu_custom_call.1} parent=0
    _
  %s8 = ssub.s32 1, %s6
  %s9 = scalar_select 0, %s8, %s6
  $region1: #{tpu_custom_call.1} parent=0
    #allocation2 [shape = 'u8[4096]{0}', space=vmem, size = 0x1000, scoped, tag = 'input window, operand 0, single buffered']
    #allocation3 [shape = 's32[1]{0}', space=sflag, size = 0x4, scoped, tag = 'scoped memory for tpu_custom_call.1']
    #allocation4 [shape = 's32[1]{0}', space=sflag, size = 0x4, scoped, tag = 'scoped memory for tpu_custom_call.1']
    #allocation5 [shape = 'u8[65536]{0}', space=vmem, size = 0x10000, scoped, tag = 'input window, operand 1, single buffered']
    #allocation6 [shape = 's32[1]{0}', space=sflag, size = 0x4, scoped, tag = 'scoped memory for tpu_custom_call.1']
    #allocation7 [shape = 'u8[65536]{0}', space=vmem, size = 0x10000, scoped, tag = 'input window, operand 3, single buffered']
    #allocation8 [shape = 'u8[4096]{0}', space=vmem, size = 0x1000, scoped, tag = 'output window, operand 0, single buffered']
    %10 = vsyncpa [#allocation3], 0
    %11 = vsyncpa [#allocation6], 0
    %12 = vsyncpa [#allocation4], 0
    // Predicated region
    $region2: #{tpu_custom_call.1} parent=1 // pred_check
      _
    $region3: #{tpu_custom_call.1} parent=1 // pred_check_branch
      %14 = sbr.rel (0) target = $region5
    $region4: #{tpu_custom_call.1} parent=1 // pred_region
      %s16 = ssub.s32 128, 128
      %17 = vsyncadd [#allocation3], %s16
      %s19 = sshll.u32 [#allocation2], 4
      %s20 = int_to_ptr.vmem [resolvable:$true] %s19
      %22 = dma.hbm_to_vmem [thread:$0]  %s0, 128, %s20, [#allocation3]
    $region5: #{tpu_custom_call.1} parent=1 // pred_fallthru
      _
    // Predicated region
    $region6: #{tpu_custom_call.1} parent=1 // pred_check
      _
    $region7: #{tpu_custom_call.1} parent=1 // pred_check_branch
      %24 = sbr.rel (0) target = $region9
    $region8: #{tpu_custom_call.1} parent=1 // pred_region
      %s26 = ssub.s32 2048, 2048
      %27 = vsyncadd [#allocation6], %s26
      %s28 = sshll.u32 [#allocation5], 4
      %s29 = int_to_ptr.vmem [resolvable:$true] %s28
      %34 = dma.hbm_to_vmem [thread:$0]  %s1, 2048, %s29, [#allocation6], 128, 128, 8
    $region9: #{tpu_custom_call.1} parent=1 // pred_fallthru
      _
    // Predicated region
    $region10: #{tpu_custom_call.1} parent=1 // pred_check
      _
    $region11: #{tpu_custom_call.1} parent=1 // pred_check_branch
      %36 = sbr.rel (0) target = $region13
    $region12: #{tpu_custom_call.1} parent=1 // pred_region
      _
    $region13: #{tpu_custom_call.1} parent=1 // pred_fallthru
      _
    // Predicated region
    $region14: #{tpu_custom_call.1} parent=1 // pred_check
      _
    $region15: #{tpu_custom_call.1} parent=1 // pred_check_branch
      %38 = sbr.rel (0) target = $region17
    $region16: #{tpu_custom_call.1} parent=1 // pred_region
      %s40 = ssub.s32 2048, 2048
      %41 = vsyncadd [#allocation6], %s40
      %s42 = sshll.u32 [#allocation7], 4
      %s43 = int_to_ptr.vmem [resolvable:$true] %s42
      %48 = dma.hbm_to_vmem [thread:$0]  %s3, 2048, %s43, [#allocation6], 128, 128, 8
    $region17: #{tpu_custom_call.1} parent=1 // pred_fallthru
      _
    // Predicated region
    $region18: #{tpu_custom_call.1} parent=1 // pred_check
      _
    $region19: #{tpu_custom_call.1} parent=1 // pred_check_branch
      %50 = sbr.rel (0) target = $region21
    $region20: #{tpu_custom_call.1} parent=1 // pred_region
      _
    $region21: #{tpu_custom_call.1} parent=1 // pred_fallthru
      _
    // Predicated region
    $region22: #{tpu_custom_call.1} parent=1 // pred_check
      _
    $region23: #{tpu_custom_call.1} parent=1 // pred_check_branch
      %52 = sbr.rel (0) target = $region25
    $region24: #{tpu_custom_call.1} parent=1 // pred_region
      %53 = dma.done [#allocation3], 128
    $region25: #{tpu_custom_call.1} parent=1 // pred_fallthru
      _
    // Predicated region
    $region26: #{tpu_custom_call.1} parent=1 // pred_check
      _
    $region27: #{tpu_custom_call.1} parent=1 // pred_check_branch
      %55 = sbr.rel (0) target = $region29
    $region28: #{tpu_custom_call.1} parent=1 // pred_region
      %56 = dma.done [#allocation6], 2048
    $region29: #{tpu_custom_call.1} parent=1 // pred_fallthru
      _
    // Predicated region
    $region30: #{tpu_custom_call.1} parent=1 // pred_check
      _
    $region31: #{tpu_custom_call.1} parent=1 // pred_check_branch
      %58 = sbr.rel (0) target = $region33
    $region32: #{tpu_custom_call.1} parent=1 // pred_region
      %59 = dma.done [#allocation6], 2048
    $region33: #{tpu_custom_call.1} parent=1 // pred_fallthru
      _
    %v60 = vld [vmem:[#allocation2] sm:$0xff]
    %v61 = vld [vmem:[#allocation5] sm:$0xff]
    %v62 = vld [vmem:[#allocation5 + $0x8] sm:$0xff]
    %v63 = vld [vmem:[#allocation5 + $0x10] sm:$0xff]
    %v64 = vld [vmem:[#allocation5 + $0x18] sm:$0xff]
    %v65 = vld [vmem:[#allocation5 + $0x20] sm:$0xff]
    %v66 = vld [vmem:[#allocation5 + $0x28] sm:$0xff]
    %v67 = vld [vmem:[#allocation5 + $0x30] sm:$0xff]
    %v68 = vld [vmem:[#allocation5 + $0x38] sm:$0xff]
    %v69 = vld [vmem:[#allocation5 + $0x40] sm:$0xff]
    %v70 = vld [vmem:[#allocation5 + $0x48] sm:$0xff]
    %v71 = vld [vmem:[#allocation5 + $0x50] sm:$0xff]
    %v72 = vld [vmem:[#allocation5 + $0x58] sm:$0xff]
    %v73 = vld [vmem:[#allocation5 + $0x60] sm:$0xff]
    %v74 = vld [vmem:[#allocation5 + $0x68] sm:$0xff]
    %v75 = vld [vmem:[#allocation5 + $0x70] sm:$0xff]
    %v76 = vld [vmem:[#allocation5 + $0x78] sm:$0xff]
    %v77 = vld [vmem:[%s2] sm:$0x1]
    %v79 = vlaneseq
    %v80 = vshrl.u32 %v79, 7
    %v81 = vsub.s32 0, %v80
    %v82 = vrot.slane %v77, %v81
    %84 = vmatprep.subr.mxu0 0.0
    %85 = vmatpush1.msra.mxu0 %v61
    %86 = vmatprep.subr.mxu0 0.0
    %87 = vmatpush1.msra.mxu0 %v62
    %88 = vmatprep.subr.mxu0 0.0
    %89 = vmatpush1.msra.mxu0 %v63
    %90 = vmatprep.subr.mxu0 0.0
    %91 = vmatpush1.msra.mxu0 %v64
    %92 = vmatprep.subr.mxu0 0.0
    %93 = vmatpush1.msra.mxu0 %v65
    %94 = vmatprep.subr.mxu0 0.0
    %95 = vmatpush1.msra.mxu0 %v66
    %96 = vmatprep.subr.mxu0 0.0
    %97 = vmatpush1.msra.mxu0 %v67
    %98 = vmatprep.subr.mxu0 0.0
    %99 = vmatpush1.msra.mxu0 %v68
    %100 = vmatprep.subr.mxu0 0.0
    %101 = vmatpush1.msra.mxu0 %v69
    %102 = vmatprep.subr.mxu0 0.0
    %103 = vmatpush1.msra.mxu0 %v70
    %104 = vmatprep.subr.mxu0 0.0
    %105 = vmatpush1.msra.mxu0 %v71
    %106 = vmatprep.subr.mxu0 0.0
    %107 = vmatpush1.msra.mxu0 %v72
    %108 = vmatprep.subr.mxu0 0.0
    %109 = vmatpush1.msra.mxu0 %v73
    %110 = vmatprep.subr.mxu0 0.0
    %111 = vmatpush1.msra.mxu0 %v74
    %112 = vmatprep.subr.mxu0 0.0
    %113 = vmatpush1.msra.mxu0 %v75
    %114 = vmatprep.subr.mxu0 0.0
    %115 = vmatpush1.msra.mxu0 %v76
    %116 = vmatprep.subr.mxu0 0.0
    %117 = vmatpush1.msra.mxu0 0.0
    %118 = vmatprep.subr.mxu0 0.0
    %119 = vmatpush1.msra.mxu0 0.0
    %120 = vmatprep.subr.mxu0 0.0
    %121 = vmatpush1.msra.mxu0 0.0
    %122 = vmatprep.subr.mxu0 0.0
    %123 = vmatpush1.msra.mxu0 0.0
    %124 = vmatprep.subr.mxu0 0.0
    %125 = vmatpush1.msra.mxu0 0.0
    %126 = vmatprep.subr.mxu0 0.0
    %127 = vmatpush1.msra.mxu0 0.0
    %128 = vmatprep.subr.mxu0 0.0
    %129 = vmatpush1.msra.mxu0 0.0
    %130 = vmatprep.subr.mxu0 0.0
    %131 = vmatpush1.msra.mxu0 0.0
    %132 = vmatprep.subr.mxu0 0.0
    %133 = vmatpush1.msra.mxu0 0.0
    %134 = vmatprep.subr.mxu0 0.0
    %135 = vmatpush1.msra.mxu0 0.0
    %136 = vmatprep.subr.mxu0 0.0
    %137 = vmatpush1.msra.mxu0 0.0
    %138 = vmatprep.subr.mxu0 0.0
    %139 = vmatpush1.msra.mxu0 0.0
    %140 = vmatprep.subr.mxu0 0.0
    %141 = vmatpush1.msra.mxu0 0.0
    %142 = vmatprep.subr.mxu0 0.0
    %143 = vmatpush1.msra.mxu0 0.0
    %144 = vmatprep.subr.mxu0 0.0
    %145 = vmatpush1.msra.mxu0 0.0
    %146 = vmatprep.subr.mxu0 0.0
    %147 = vmatpush1.msra.mxu0 0.0
    %148 = vmatprep.mubr.f32.mxu0 0.0
    %149 = vmatmul.mubr.f32.gmra.mrb[0].mxu0 %v60
    %v150 = vpop.f32.mrb[0].mxu0
    %v151 = vadd.f32 %v82, %v150
    %v152 = vpop.f32.mrb[0].mxu0
    %153 = vdwg.mxu0
    %v154 = vtanh.pop %v151
    %v155 = vld [vmem:[#allocation7] sm:$0xff]
    %v156 = vld [vmem:[#allocation7 + $0x8] sm:$0xff]
    %v157 = vld [vmem:[#allocation7 + $0x10] sm:$0xff]
    %v158 = vld [vmem:[#allocation7 + $0x18] sm:$0xff]
    %v159 = vld [vmem:[#allocation7 + $0x20] sm:$0xff]
    %v160 = vld [vmem:[#allocation7 + $0x28] sm:$0xff]
    %v161 = vld [vmem:[#allocation7 + $0x30] sm:$0xff]
    %v162 = vld [vmem:[#allocation7 + $0x38] sm:$0xff]
    %v163 = vld [vmem:[#allocation7 + $0x40] sm:$0xff]
    %v164 = vld [vmem:[#allocation7 + $0x48] sm:$0xff]
    %v165 = vld [vmem:[#allocation7 + $0x50] sm:$0xff]
    %v166 = vld [vmem:[#allocation7 + $0x58] sm:$0xff]
    %v167 = vld [vmem:[#allocation7 + $0x60] sm:$0xff]
    %v168 = vld [vmem:[#allocation7 + $0x68] sm:$0xff]
    %v169 = vld [vmem:[#allocation7 + $0x70] sm:$0xff]
    %v170 = vld [vmem:[#allocation7 + $0x78] sm:$0xff]
    %v171 = vld [vmem:[%s4] sm:$0x1]
    %v173 = vlaneseq
    %v174 = vshrl.u32 %v173, 7
    %v175 = vsub.s32 0, %v174
    %v176 = vrot.slane %v171, %v175
    %178 = vmatprep.subr.mxu0 0.0
    %179 = vmatpush1.msra.mxu0 %v155
    %180 = vmatprep.subr.mxu0 0.0
    %181 = vmatpush1.msra.mxu0 %v156
    %182 = vmatprep.subr.mxu0 0.0
    %183 = vmatpush1.msra.mxu0 %v157
    %184 = vmatprep.subr.mxu0 0.0
    %185 = vmatpush1.msra.mxu0 %v158
    %186 = vmatprep.subr.mxu0 0.0
    %187 = vmatpush1.msra.mxu0 %v159
    %188 = vmatprep.subr.mxu0 0.0
    %189 = vmatpush1.msra.mxu0 %v160
    %190 = vmatprep.subr.mxu0 0.0
    %191 = vmatpush1.msra.mxu0 %v161
    %192 = vmatprep.subr.mxu0 0.0
    %193 = vmatpush1.msra.mxu0 %v162
    %194 = vmatprep.subr.mxu0 0.0
    %195 = vmatpush1.msra.mxu0 %v163
    %196 = vmatprep.subr.mxu0 0.0
    %197 = vmatpush1.msra.mxu0 %v164
    %198 = vmatprep.subr.mxu0 0.0
    %199 = vmatpush1.msra.mxu0 %v165
    %200 = vmatprep.subr.mxu0 0.0
    %201 = vmatpush1.msra.mxu0 %v166
    %202 = vmatprep.subr.mxu0 0.0
    %203 = vmatpush1.msra.mxu0 %v167
    %204 = vmatprep.subr.mxu0 0.0
    %205 = vmatpush1.msra.mxu0 %v168
    %206 = vmatprep.subr.mxu0 0.0
    %207 = vmatpush1.msra.mxu0 %v169
    %208 = vmatprep.subr.mxu0 0.0
    %209 = vmatpush1.msra.mxu0 %v170
    %210 = vmatprep.subr.mxu0 0.0
    %211 = vmatpush1.msra.mxu0 0.0
    %212 = vmatprep.subr.mxu0 0.0
    %213 = vmatpush1.msra.mxu0 0.0
    %214 = vmatprep.subr.mxu0 0.0
    %215 = vmatpush1.msra.mxu0 0.0
    %216 = vmatprep.subr.mxu0 0.0
    %217 = vmatpush1.msra.mxu0 0.0
    %218 = vmatprep.subr.mxu0 0.0
    %219 = vmatpush1.msra.mxu0 0.0
    %220 = vmatprep.subr.mxu0 0.0
    %221 = vmatpush1.msra.mxu0 0.0
    %222 = vmatprep.subr.mxu0 0.0
    %223 = vmatpush1.msra.mxu0 0.0
    %224 = vmatprep.subr.mxu0 0.0
    %225 = vmatpush1.msra.mxu0 0.0
    %226 = vmatprep.subr.mxu0 0.0
    %227 = vmatpush1.msra.mxu0 0.0
    %228 = vmatprep.subr.mxu0 0.0
    %229 = vmatpush1.msra.mxu0 0.0
    %230 = vmatprep.subr.mxu0 0.0
    %231 = vmatpush1.msra.mxu0 0.0
    %232 = vmatprep.subr.mxu0 0.0
    %233 = vmatpush1.msra.mxu0 0.0
    %234 = vmatprep.subr.mxu0 0.0
    %235 = vmatpush1.msra.mxu0 0.0
    %236 = vmatprep.subr.mxu0 0.0
    %237 = vmatpush1.msra.mxu0 0.0
    %238 = vmatprep.subr.mxu0 0.0
    %239 = vmatpush1.msra.mxu0 0.0
    %240 = vmatprep.subr.mxu0 0.0
    %241 = vmatpush1.msra.mxu0 0.0
    %242 = vmatprep.mubr.f32.mxu0 0.0
    %243 = vmatmul.mubr.f32.gmra.mrb[0].mxu0 %v154
    %v244 = vpop.f32.mrb[0].mxu0
    %v245 = vadd.f32 %v176, %v244
    %v246 = vpop.f32.mrb[0].mxu0
    %247 = vdwg.mxu0
    %248 = vst [vmem:[#allocation8] sm:$0xff] %v245
    // Predicated region
    $region34: #{tpu_custom_call.1} parent=1 // pred_check
      _
    $region35: #{tpu_custom_call.1} parent=1 // pred_check_branch
      %250 = sbr.rel (0) target = $region37
    $region36: #{tpu_custom_call.1} parent=1 // pred_region
      %s252 = ssub.s32 128, 128
      %253 = vsyncadd [#allocation4], %s252
      %s255 = sshll.u32 [#allocation8], 4
      %s256 = int_to_ptr.vmem [resolvable:$true] %s255
      %258 = dma.vmem_to_hbm [thread:$0]  %s256, 128, %s5, [#allocation4]
    $region37: #{tpu_custom_call.1} parent=1 // pred_fallthru
      _
    // Predicated region
    $region38: #{tpu_custom_call.1} parent=1 // pred_check
      _
    $region39: #{tpu_custom_call.1} parent=1 // pred_check_branch
      %260 = sbr.rel (0) target = $region41
    $region40: #{tpu_custom_call.1} parent=1 // pred_region
      %261 = dma.done [#allocation4], 128
    $region41: #{tpu_custom_call.1} parent=1 // pred_fallthru
      _
    %262 = vsyncpa [#allocation3], 1
    %263 = vsyncpa [#allocation6], 1
    %264 = vsyncpa [#allocation4], 1

// kernel: tpu_custom_call.1
$region0: #{tpu_custom_call.1}
  #allocation0 [shape = 'u32[]', space=smem, size = 0x4, offset = 0x4, fixed_abs, tag = 'smem constant byte address 0x4 - core index']
  #allocation1 [shape = 'u32[144,128]{1,0:T(1,128)}', space=vmem, size = 0x12000, scoped, tag = 'internal scratch']
  %s0 = inlined_call_operand.hbm [shape: f32[5,1024], index: 0, kind: input, shape index: {}]
  %s1 = inlined_call_operand.hbm [shape: f32[128,128], index: 1, kind: input, shape index: {}]
  %s2 = inlined_call_operand.vmem [shape: f32[1,128], index: 2, kind: input, shape index: {}]
  %s3 = inlined_call_operand.hbm [shape: f32[128,128], index: 3, kind: input, shape index: {}]
  %s4 = inlined_call_operand.vmem [shape: f32[1,128], index: 4, kind: input, shape index: {}]
  %s5 = inlined_call_operand.hbm [shape: f32[5,128], index: 5, kind: output, shape index: {}]
  %s6 = sld [smem:[#allocation0]]
  $region42: #{tpu_custom_call.1} parent=0
    _
  %s8 = ssub.s32 1, %s6
  %s9 = scalar_select 0, %s8, %s6
  $region1: #{tpu_custom_call.1} parent=0
    #allocation2 [shape = 'u8[4096]{0}', space=vmem, size = 0x1000, scoped, tag = 'input window, operand 0, single buffered']
    #allocation3 [shape = 's32[1]{0}', space=sflag, size = 0x4, scoped, tag = 'scoped memory for tpu_custom_call.1']
    #allocation4 [shape = 's32[1]{0}', space=sflag, size = 0x4, scoped, tag = 'scoped memory for tpu_custom_call.1']
    #allocation5 [shape = 'u8[65536]{0}', space=vmem, size = 0x10000, scoped, tag = 'input window, operand 1, single buffered']
    #allocation6 [shape = 's32[1]{0}', space=sflag, size = 0x4, scoped, tag = 'scoped memory for tpu_custom_call.1']
    #allocation7 [shape = 'u8[65536]{0}', space=vmem, size = 0x10000, scoped, tag = 'input window, operand 3, single buffered']
    #allocation8 [shape = 'u8[4096]{0}', space=vmem, size = 0x1000, scoped, tag = 'output window, operand 0, single buffered']
    %10 = vsyncpa [#allocation3], 0
    %11 = vsyncpa [#allocation6], 0
    %12 = vsyncpa [#allocation4], 0
    // Predicated region
    $region2: #{tpu_custom_call.1} parent=1 // pred_check
      _
    $region3: #{tpu_custom_call.1} parent=1 // pred_check_branch
      %14 = sbr.rel (0) target = $region5
    $region4: #{tpu_custom_call.1} parent=1 // pred_region
      %s16 = ssub.s32 128, 128
      %17 = vsyncadd [#allocation3], %s16
      %s19 = sshll.u32 [#allocation2], 4
      %s20 = int_to_ptr.vmem [resolvable:$true] %s19
      %22 = dma.hbm_to_vmem [thread:$0]  %s0, 128, %s20, [#allocation3]
    $region5: #{tpu_custom_call.1} parent=1 // pred_fallthru
      _
    // Predicated region
    $region6: #{tpu_custom_call.1} parent=1 // pred_check
      _
    $region7: #{tpu_custom_call.1} parent=1 // pred_check_branch
      %24 = sbr.rel (0) target = $region9
    $region8: #{tpu_custom_call.1} parent=1 // pred_region
      %s26 = ssub.s32 2048, 2048
      %27 = vsyncadd [#allocation6], %s26
      %s28 = sshll.u32 [#allocation5], 4
      %s29 = int_to_ptr.vmem [resolvable:$true] %s28
      %34 = dma.hbm_to_vmem [thread:$0]  %s1, 2048, %s29, [#allocation6], 128, 128, 8
    $region9: #{tpu_custom_call.1} parent=1 // pred_fallthru
      _
    // Predicated region
    $region10: #{tpu_custom_call.1} parent=1 // pred_check
      _
    $region11: #{tpu_custom_call.1} parent=1 // pred_check_branch
      %36 = sbr.rel (0) target = $region13
    $region12: #{tpu_custom_call.1} parent=1 // pred_region
      _
    $region13: #{tpu_custom_call.1} parent=1 // pred_fallthru
      _
    // Predicated region
    $region14: #{tpu_custom_call.1} parent=1 // pred_check
      _
    $region15: #{tpu_custom_call.1} parent=1 // pred_check_branch
      %38 = sbr.rel (0) target = $region17
    $region16: #{tpu_custom_call.1} parent=1 // pred_region
      %s40 = ssub.s32 2048, 2048
      %41 = vsyncadd [#allocation6], %s40
      %s42 = sshll.u32 [#allocation7], 4
      %s43 = int_to_ptr.vmem [resolvable:$true] %s42
      %48 = dma.hbm_to_vmem [thread:$0]  %s3, 2048, %s43, [#allocation6], 128, 128, 8
    $region17: #{tpu_custom_call.1} parent=1 // pred_fallthru
      _
    // Predicated region
    $region18: #{tpu_custom_call.1} parent=1 // pred_check
      _
    $region19: #{tpu_custom_call.1} parent=1 // pred_check_branch
      %50 = sbr.rel (0) target = $region21
    $region20: #{tpu_custom_call.1} parent=1 // pred_region
      _
    $region21: #{tpu_custom_call.1} parent=1 // pred_fallthru
      _
    // Predicated region
    $region22: #{tpu_custom_call.1} parent=1 // pred_check
      _
    $region23: #{tpu_custom_call.1} parent=1 // pred_check_branch
      %52 = sbr.rel (0) target = $region25
    $region24: #{tpu_custom_call.1} parent=1 // pred_region
      %53 = dma.done [#allocation3], 128
    $region25: #{tpu_custom_call.1} parent=1 // pred_fallthru
      _
    // Predicated region
    $region26: #{tpu_custom_call.1} parent=1 // pred_check
      _
    $region27: #{tpu_custom_call.1} parent=1 // pred_check_branch
      %55 = sbr.rel (0) target = $region29
    $region28: #{tpu_custom_call.1} parent=1 // pred_region
      %56 = dma.done [#allocation6], 2048
    $region29: #{tpu_custom_call.1} parent=1 // pred_fallthru
      _
    // Predicated region
    $region30: #{tpu_custom_call.1} parent=1 // pred_check
      _
    $region31: #{tpu_custom_call.1} parent=1 // pred_check_branch
      %58 = sbr.rel (0) target = $region33
    $region32: #{tpu_custom_call.1} parent=1 // pred_region
      %59 = dma.done [#allocation6], 2048
    $region33: #{tpu_custom_call.1} parent=1 // pred_fallthru
      _
    %v60 = vld [vmem:[#allocation2] sm:$0xff]
    %v61 = vld [vmem:[#allocation5] sm:$0xff]
    %v62 = vld [vmem:[#allocation5 + $0x8] sm:$0xff]
    %v63 = vld [vmem:[#allocation5 + $0x10] sm:$0xff]
    %v64 = vld [vmem:[#allocation5 + $0x18] sm:$0xff]
    %v65 = vld [vmem:[#allocation5 + $0x20] sm:$0xff]
    %v66 = vld [vmem:[#allocation5 + $0x28] sm:$0xff]
    %v67 = vld [vmem:[#allocation5 + $0x30] sm:$0xff]
    %v68 = vld [vmem:[#allocation5 + $0x38] sm:$0xff]
    %v69 = vld [vmem:[#allocation5 + $0x40] sm:$0xff]
    %v70 = vld [vmem:[#allocation5 + $0x48] sm:$0xff]
    %v71 = vld [vmem:[#allocation5 + $0x50] sm:$0xff]
    %v72 = vld [vmem:[#allocation5 + $0x58] sm:$0xff]
    %v73 = vld [vmem:[#allocation5 + $0x60] sm:$0xff]
    %v74 = vld [vmem:[#allocation5 + $0x68] sm:$0xff]
    %v75 = vld [vmem:[#allocation5 + $0x70] sm:$0xff]
    %v76 = vld [vmem:[#allocation5 + $0x78] sm:$0xff]
    %v77 = vld [vmem:[%s2] sm:$0x1]
    %v79 = vlaneseq
    %v80 = vshrl.u32 %v79, 7
    %v81 = vsub.s32 0, %v80
    %v82 = vrot.slane %v77, %v81
    %84 = vmatprep.subr.mxu0 0.0
    %85 = vmatpush1.msra.mxu0 %v61
    %86 = vmatprep.subr.mxu0 0.0
    %87 = vmatpush1.msra.mxu0 %v62
    %88 = vmatprep.subr.mxu0 0.0
    %89 = vmatpush1.msra.mxu0 %v63
    %90 = vmatprep.subr.mxu0 0.0
    %91 = vmatpush1.msra.mxu0 %v64
    %92 = vmatprep.subr.mxu0 0.0
    %93 = vmatpush1.msra.mxu0 %v65
    %94 = vmatprep.subr.mxu0 0.0
    %95 = vmatpush1.msra.mxu0 %v66
    %96 = vmatprep.subr.mxu0 0.0
    %97 = vmatpush1.msra.mxu0 %v67
    %98 = vmatprep.subr.mxu0 0.0
    %99 = vmatpush1.msra.mxu0 %v68
    %100 = vmatprep.subr.mxu0 0.0
    %101 = vmatpush1.msra.mxu0 %v69
    %102 = vmatprep.subr.mxu0 0.0
    %103 = vmatpush1.msra.mxu0 %v70
    %104 = vmatprep.subr.mxu0 0.0
    %105 = vmatpush1.msra.mxu0 %v71
    %106 = vmatprep.subr.mxu0 0.0
    %107 = vmatpush1.msra.mxu0 %v72
    %108 = vmatprep.subr.mxu0 0.0
    %109 = vmatpush1.msra.mxu0 %v73
    %110 = vmatprep.subr.mxu0 0.0
    %111 = vmatpush1.msra.mxu0 %v74
    %112 = vmatprep.subr.mxu0 0.0
    %113 = vmatpush1.msra.mxu0 %v75
    %114 = vmatprep.subr.mxu0 0.0
    %115 = vmatpush1.msra.mxu0 %v76
    %116 = vmatprep.subr.mxu0 0.0
    %117 = vmatpush1.msra.mxu0 0.0
    %118 = vmatprep.subr.mxu0 0.0
    %119 = vmatpush1.msra.mxu0 0.0
    %120 = vmatprep.subr.mxu0 0.0
    %121 = vmatpush1.msra.mxu0 0.0
    %122 = vmatprep.subr.mxu0 0.0
    %123 = vmatpush1.msra.mxu0 0.0
    %124 = vmatprep.subr.mxu0 0.0
    %125 = vmatpush1.msra.mxu0 0.0
    %126 = vmatprep.subr.mxu0 0.0
    %127 = vmatpush1.msra.mxu0 0.0
    %128 = vmatprep.subr.mxu0 0.0
    %129 = vmatpush1.msra.mxu0 0.0
    %130 = vmatprep.subr.mxu0 0.0
    %131 = vmatpush1.msra.mxu0 0.0
    %132 = vmatprep.subr.mxu0 0.0
    %133 = vmatpush1.msra.mxu0 0.0
    %134 = vmatprep.subr.mxu0 0.0
    %135 = vmatpush1.msra.mxu0 0.0
    %136 = vmatprep.subr.mxu0 0.0
    %137 = vmatpush1.msra.mxu0 0.0
    %138 = vmatprep.subr.mxu0 0.0
    %139 = vmatpush1.msra.mxu0 0.0
    %140 = vmatprep.subr.mxu0 0.0
    %141 = vmatpush1.msra.mxu0 0.0
    %142 = vmatprep.subr.mxu0 0.0
    %143 = vmatpush1.msra.mxu0 0.0
    %144 = vmatprep.subr.mxu0 0.0
    %145 = vmatpush1.msra.mxu0 0.0
    %146 = vmatprep.subr.mxu0 0.0
    %147 = vmatpush1.msra.mxu0 0.0
    %148 = vmatprep.mubr.f32.mxu0 0.0
    %149 = vmatmul.mubr.f32.gmra.mrb[0].mxu0 %v60
    %v150 = vpop.f32.mrb[0].mxu0
    %v151 = vadd.f32 %v82, %v150
    %v152 = vpop.f32.mrb[0].mxu0
    %153 = vdwg.mxu0
    %v154 = vtanh.pop %v151
    %v155 = vld [vmem:[#allocation7] sm:$0xff]
    %v156 = vld [vmem:[#allocation7 + $0x8] sm:$0xff]
    %v157 = vld [vmem:[#allocation7 + $0x10] sm:$0xff]
    %v158 = vld [vmem:[#allocation7 + $0x18] sm:$0xff]
    %v159 = vld [vmem:[#allocation7 + $0x20] sm:$0xff]
    %v160 = vld [vmem:[#allocation7 + $0x28] sm:$0xff]
    %v161 = vld [vmem:[#allocation7 + $0x30] sm:$0xff]
    %v162 = vld [vmem:[#allocation7 + $0x38] sm:$0xff]
    %v163 = vld [vmem:[#allocation7 + $0x40] sm:$0xff]
    %v164 = vld [vmem:[#allocation7 + $0x48] sm:$0xff]
    %v165 = vld [vmem:[#allocation7 + $0x50] sm:$0xff]
    %v166 = vld [vmem:[#allocation7 + $0x58] sm:$0xff]
    %v167 = vld [vmem:[#allocation7 + $0x60] sm:$0xff]
    %v168 = vld [vmem:[#allocation7 + $0x68] sm:$0xff]
    %v169 = vld [vmem:[#allocation7 + $0x70] sm:$0xff]
    %v170 = vld [vmem:[#allocation7 + $0x78] sm:$0xff]
    %v171 = vld [vmem:[%s4] sm:$0x1]
    %v173 = vlaneseq
    %v174 = vshrl.u32 %v173, 7
    %v175 = vsub.s32 0, %v174
    %v176 = vrot.slane %v171, %v175
    %178 = vmatprep.subr.mxu0 0.0
    %179 = vmatpush1.msra.mxu0 %v155
    %180 = vmatprep.subr.mxu0 0.0
    %181 = vmatpush1.msra.mxu0 %v156
    %182 = vmatprep.subr.mxu0 0.0
    %183 = vmatpush1.msra.mxu0 %v157
    %184 = vmatprep.subr.mxu0 0.0
    %185 = vmatpush1.msra.mxu0 %v158
    %186 = vmatprep.subr.mxu0 0.0
    %187 = vmatpush1.msra.mxu0 %v159
    %188 = vmatprep.subr.mxu0 0.0
    %189 = vmatpush1.msra.mxu0 %v160
    %190 = vmatprep.subr.mxu0 0.0
    %191 = vmatpush1.msra.mxu0 %v161
    %192 = vmatprep.subr.mxu0 0.0
    %193 = vmatpush1.msra.mxu0 %v162
    %194 = vmatprep.subr.mxu0 0.0
    %195 = vmatpush1.msra.mxu0 %v163
    %196 = vmatprep.subr.mxu0 0.0
    %197 = vmatpush1.msra.mxu0 %v164
    %198 = vmatprep.subr.mxu0 0.0
    %199 = vmatpush1.msra.mxu0 %v165
    %200 = vmatprep.subr.mxu0 0.0
    %201 = vmatpush1.msra.mxu0 %v166
    %202 = vmatprep.subr.mxu0 0.0
    %203 = vmatpush1.msra.mxu0 %v167
    %204 = vmatprep.subr.mxu0 0.0
    %205 = vmatpush1.msra.mxu0 %v168
    %206 = vmatprep.subr.mxu0 0.0
    %207 = vmatpush1.msra.mxu0 %v169
    %208 = vmatprep.subr.mxu0 0.0
    %209 = vmatpush1.msra.mxu0 %v170
    %210 = vmatprep.subr.mxu0 0.0
    %211 = vmatpush1.msra.mxu0 0.0
    %212 = vmatprep.subr.mxu0 0.0
    %213 = vmatpush1.msra.mxu0 0.0
    %214 = vmatprep.subr.mxu0 0.0
    %215 = vmatpush1.msra.mxu0 0.0
    %216 = vmatprep.subr.mxu0 0.0
    %217 = vmatpush1.msra.mxu0 0.0
    %218 = vmatprep.subr.mxu0 0.0
    %219 = vmatpush1.msra.mxu0 0.0
    %220 = vmatprep.subr.mxu0 0.0
    %221 = vmatpush1.msra.mxu0 0.0
    %222 = vmatprep.subr.mxu0 0.0
    %223 = vmatpush1.msra.mxu0 0.0
    %224 = vmatprep.subr.mxu0 0.0
    %225 = vmatpush1.msra.mxu0 0.0
    %226 = vmatprep.subr.mxu0 0.0
    %227 = vmatpush1.msra.mxu0 0.0
    %228 = vmatprep.subr.mxu0 0.0
    %229 = vmatpush1.msra.mxu0 0.0
    %230 = vmatprep.subr.mxu0 0.0
    %231 = vmatpush1.msra.mxu0 0.0
    %232 = vmatprep.subr.mxu0 0.0
    %233 = vmatpush1.msra.mxu0 0.0
    %234 = vmatprep.subr.mxu0 0.0
    %235 = vmatpush1.msra.mxu0 0.0
    %236 = vmatprep.subr.mxu0 0.0
    %237 = vmatpush1.msra.mxu0 0.0
    %238 = vmatprep.subr.mxu0 0.0
    %239 = vmatpush1.msra.mxu0 0.0
    %240 = vmatprep.subr.mxu0 0.0
    %241 = vmatpush1.msra.mxu0 0.0
    %242 = vmatprep.mubr.f32.mxu0 0.0
    %243 = vmatmul.mubr.f32.gmra.mrb[0].mxu0 %v154
    %v244 = vpop.f32.mrb[0].mxu0
    %v245 = vadd.f32 %v176, %v244
    %v246 = vpop.f32.mrb[0].mxu0
    %247 = vdwg.mxu0
    %248 = vst [vmem:[#allocation8] sm:$0xff] %v245
    // Predicated region
    $region34: #{tpu_custom_call.1} parent=1 // pred_check
      _
    $region35: #{tpu_custom_call.1} parent=1 // pred_check_branch
      %250 = sbr.rel (0) target = $region37
    $region36: #{tpu_custom_call.1} parent=1 // pred_region
      %s252 = ssub.s32 128, 128
      %253 = vsyncadd [#allocation4], %s252
      %s255 = sshll.u32 [#allocation8], 4
      %s256 = int_to_ptr.vmem [resolvable:$true] %s255
      %258 = dma.vmem_to_hbm [thread:$0]  %s256, 128, %s5, [#allocation4]
    $region37: #{tpu_custom_call.1} parent=1 // pred_fallthru
      _
    // Predicated region
    $region38: #{tpu_custom_call.1} parent=1 // pred_check
      _
    $region39: #{tpu_custom_call.1} parent=1 // pred_check_branch
      %260 = sbr.rel (0) target = $region41
    $region40: #{tpu_custom_call.1} parent=1 // pred_region
      %261 = dma.done [#allocation4], 128
    $region41: #{tpu_custom_call.1} parent=1 // pred_fallthru
      _
    %262 = vsyncpa [#allocation3], 1
    %263 = vsyncpa [#allocation6], 1
    %264 = vsyncpa [#allocation4], 1

</llo_original>
